<compile_context>
chip_gen: v6e
topology: v6e:2x2x1
jax: 0.10.0
libtpu: 0.0.40
codegen_flags: <defaults>
</compile_context>

<pallas_src>
import math

import jax
import jax.numpy as jnp
from jax.experimental import pallas as pl
from jax.experimental.pallas import tpu as pltpu


# ---------------------------------------------------------------------------
# in-kernel softmax over the last (lane) axis, f32 math
# ---------------------------------------------------------------------------
def _softmax_rows(x_f32):
    x = x_f32 - jnp.max(x_f32, axis=-1, keepdims=True)
    p = jnp.exp(x)
    denom = jnp.sum(p, axis=-1, keepdims=True)
    # EUP approximate reciprocal: runs in its own issue slot, ~free vs. divide.
    return p * pl.reciprocal(denom, approx=True)


def _softmax_kernel(x_ref, o_ref):
    x = x_ref[...].astype(jnp.float32)
    o_ref[...] = _softmax_rows(x).astype(o_ref.dtype)


def _masked_softmax_kernel(x_ref, m_ref, o_ref):
    x = x_ref[...].astype(jnp.float32)
    # masked_fill(~mask, finfo(input dtype).min): mask==0 -> dtype min
    fill = float(jnp.finfo(x_ref.dtype).min)
    x = jnp.where(m_ref[...] != 0, x, fill)
    o_ref[...] = _softmax_rows(x).astype(o_ref.dtype)


# ---------------------------------------------------------------------------
# wrapper
# ---------------------------------------------------------------------------
def _choose_row_block(rows, n, masked, target_bytes=1 << 20):
    """Pick a row-tile size: big enough to fill VMEM usefully, multiple of 8."""
    bytes_per_row = 4 * n * (3 if masked else 2)   # x (+mask) + out, f32/int32
    tr = (target_bytes // max(bytes_per_row, 1)) // 8 * 8
    tr = max(tr, 8)
    if tr >= rows:
        return rows                                # full extent is always legal
    return int(tr)


def masked_softmax(x, mask=None, dim=-1):
    orig_shape = x.shape
    ndim = x.ndim
    axis = dim % ndim

    if mask is not None:
        mask = jnp.broadcast_to(mask, orig_shape)

    # Layout plumbing (wrapper-side): softmax axis -> lane (last) dimension.
    if axis != ndim - 1:
        x = jnp.moveaxis(x, axis, -1)
        if mask is not None:
            mask = jnp.moveaxis(mask, axis, -1)

    work_shape = x.shape
    n = work_shape[-1]
    rows = int(math.prod(work_shape[:-1]))         # () -> 1 for 1-D inputs
    x2 = x.reshape(rows, n)

    tr = _choose_row_block(rows, n, masked=mask is not None)
    row_spec = pl.BlockSpec((tr, n), lambda i: (i, 0))
    grid = (pl.cdiv(rows, tr),)

    if mask is None:
        kernel = _softmax_kernel
        in_specs = [row_spec]
        args = (x2,)
    else:
        kernel = _masked_softmax_kernel
        in_specs = [row_spec, row_spec]
        args = (x2, mask.astype(jnp.int32).reshape(rows, n))

    out2 = pl.pallas_call(
        kernel,
        out_shape=jax.ShapeDtypeStruct((rows, n), x.dtype),
        grid=grid,
        in_specs=in_specs,
        out_specs=row_spec,
        compiler_params=pltpu.CompilerParams(
            dimension_semantics=("parallel",),      # independent row tiles -> 2 TCs on v7x
            vmem_limit_bytes=32 * 1024 * 1024,
        ),
    )(*args)

    out = out2.reshape(work_shape)
    if axis != ndim - 1:
        out = jnp.moveaxis(out, -1, axis)
    return out


# ---------------------------------------------------------------------------
# pure-JAX reference
# ---------------------------------------------------------------------------
def masked_softmax_reference(x, mask, dim):
    if mask is not None:
        x = jnp.where(jnp.broadcast_to(mask, x.shape), x, jnp.finfo(x.dtype).min)
    return jax.nn.softmax(x, axis=dim)


# ---------------------------------------------------------------------------
if __name__ == "__main__":
    # attention-score-like shape: (batch, heads, q_len, k_len); lane-dense last dim
    B, H, SQ, SK = 2, 4, 16, 128

    key = jax.random.PRNGKey(0)
    kx, km = jax.random.split(key)
    x = jax.random.normal(kx, (B, H, SQ, SK), dtype=jnp.float32)
    mask = jax.random.bernoulli(km, 0.8, (B, H, SQ, SK))

    # masked softmax over the last dim
    out = masked_softmax(x, mask, dim=-1)
    out = jax.block_until_ready(out)
    ref = masked_softmax_reference(x, mask, -1)
    assert out.shape == x.shape
    assert jnp.allclose(out, ref, rtol=2e-3, atol=2e-3), (
        f"max abs err {jnp.max(jnp.abs(out - ref))}"
    )

    # mask=None path
    out2 = jax.block_until_ready(masked_softmax(x, None, dim=-1))
    ref2 = jax.nn.softmax(x, axis=-1)
    assert jnp.allclose(out2, ref2, rtol=2e-3, atol=2e-3)

    # non-last softmax dim (wrapper moves the axis to lanes)
    out3 = jax.block_until_ready(masked_softmax(x, mask, dim=1))
    ref3 = masked_softmax_reference(x, mask, 1)
    assert jnp.allclose(out3, ref3, rtol=2e-3, atol=2e-3)

    print("KERNEL_OK")
</pallas_src>

<mosaic_0001>
module attributes {stable_mosaic.version = 11 : i64} {
  func.func @_masked_softmax_kernel(%arg0: i32, %arg1: memref<128x128xf32, #tpu.memory_space<vmem>>, %arg2: memref<128x128xi32, #tpu.memory_space<vmem>>, %arg3: memref<128x128xf32, #tpu.memory_space<vmem>>) attributes {dimension_semantics = [#tpu.dimension_semantics<parallel>], iteration_bounds = array<i64: 1>, scalar_prefetch = 0 : i64, scratch_operands = 0 : i64, tpu.core_type = #tpu.core_type<tc>, window_params = [{transform_indices = @transform_0, window_bounds = array<i64: 128, 128>}, {transform_indices = @transform_1, window_bounds = array<i64: 128, 128>}, {transform_indices = @transform_2, window_bounds = array<i64: 128, 128>}]} {
    %c0 = arith.constant 0 : index
    %c0_0 = arith.constant 0 : index
    %0 = vector.load %arg1[%c0, %c0_0] : memref<128x128xf32, #tpu.memory_space<vmem>>, vector<128x128xf32>
    %c0_1 = arith.constant 0 : index
    %c0_2 = arith.constant 0 : index
    %1 = vector.load %arg2[%c0_1, %c0_2] : memref<128x128xi32, #tpu.memory_space<vmem>>, vector<128x128xi32>
    %c0_i32 = arith.constant 0 : i32
    %2 = vector.broadcast %c0_i32 : i32 to vector<128x128xi32>
    %3 = arith.cmpi ne, %1, %2 : vector<128x128xi32>
    %cst = arith.constant -3.40282347E+38 : f32
    %4 = vector.broadcast %cst : f32 to vector<128x128xf32>
    %5 = arith.select %3, %0, %4 : vector<128x128xi1>, vector<128x128xf32>
    %cst_3 = arith.constant dense<0xFF800000> : vector<128xf32>
    %6 = vector.multi_reduction <maximumf>, %5, %cst_3 [1] : vector<128x128xf32> to vector<128xf32>
    %7 = vector.shape_cast %6 : vector<128xf32> to vector<128x1xf32>
    %8 = vector.broadcast %7 : vector<128x1xf32> to vector<128x128xf32>
    %9 = arith.subf %5, %8 : vector<128x128xf32>
    %10 = math.exp %9 : vector<128x128xf32>
    %cst_4 = arith.constant dense<0.000000e+00> : vector<128xf32>
    %11 = vector.multi_reduction <add>, %10, %cst_4 [1] : vector<128x128xf32> to vector<128xf32>
    %12 = vector.shape_cast %11 : vector<128xf32> to vector<128x1xf32>
    %13 = tpu.reciprocal %12 {approx = true} : vector<128x1xf32> -> vector<128x1xf32>
    %14 = vector.broadcast %13 : vector<128x1xf32> to vector<128x128xf32>
    %15 = arith.mulf %10, %14 : vector<128x128xf32>
    %c0_5 = arith.constant 0 : index
    %c0_6 = arith.constant 0 : index
    %16 = vector.load %arg3[%c0_5, %c0_6] : memref<128x128xf32, #tpu.memory_space<vmem>>, vector<128x128xf32>
    tpu.vector_store %arg3[%c0_5, %c0_6], %15 {strides = array<i32>} : memref<128x128xf32, #tpu.memory_space<vmem>>, vector<128x128xf32>,
    return
  }
  func.func @transform_0(%arg0: i32) -> (i32, i32) {
    %c0_i32 = arith.constant 0 : i32
    %c0_i32_0 = arith.constant 0 : i32
    return %arg0, %c0_i32 : i32, i32
  }
  func.func @transform_1(%arg0: i32) -> (i32, i32) {
    %c0_i32 = arith.constant 0 : i32
    %c0_i32_0 = arith.constant 0 : i32
    return %arg0, %c0_i32 : i32, i32
  }
  func.func @transform_2(%arg0: i32) -> (i32, i32) {
    %c0_i32 = arith.constant 0 : i32
    %c0_i32_0 = arith.constant 0 : i32
    return %arg0, %c0_i32 : i32, i32
  }
}

</mosaic_0001>

<llo_original>
// kernel: tpu_custom_call.1
$region0: #{tpu_custom_call.1}
  #allocation0 [shape = 'u32[]', space=smem, size = 0x4, offset = 0x4, fixed_abs, tag = 'smem constant byte address 0x4 - core index']
  #allocation1 [shape = 'u32[144,128]{1,0:T(1,128)}', space=vmem, size = 0x12000, scoped, tag = 'internal scratch']
  %s0 = inlined_call_operand.hbm [shape: f32[128,128], index: 0, kind: input, shape index: {}]
  %s1 = inlined_call_operand.hbm [shape: s32[128,128], index: 1, kind: input, shape index: {}]
  %s2 = inlined_call_operand.hbm [shape: f32[128,128], index: 2, kind: output, shape index: {}]
  %s3 = sld [smem:[#allocation0]]
  $region26: #{tpu_custom_call.1} parent=0
    _
  %s5 = ssub.s32 1, %s3
  %s6 = scalar_select 0, %s5, %s3
  $region1: #{tpu_custom_call.1} parent=0
    #allocation2 [shape = 'u8[65536]{0}', space=vmem, size = 0x10000, scoped, tag = 'input window, operand 0, single buffered']
    #allocation3 [shape = 's32[1]{0}', space=sflag, size = 0x4, scoped, tag = 'scoped memory for tpu_custom_call.1']
    #allocation4 [shape = 's32[1]{0}', space=sflag, size = 0x4, scoped, tag = 'scoped memory for tpu_custom_call.1']
    #allocation5 [shape = 'u8[65536]{0}', space=vmem, size = 0x10000, scoped, tag = 'input window, operand 1, single buffered']
    #allocation6 [shape = 's32[1]{0}', space=sflag, size = 0x4, scoped, tag = 'scoped memory for tpu_custom_call.1']
    #allocation7 [shape = 'u8[65536]{0}', space=vmem, size = 0x10000, scoped, tag = 'output window, operand 0, single buffered']
    %7 = vsyncpa [#allocation3], 0
    %8 = vsyncpa [#allocation6], 0
    %9 = vsyncpa [#allocation4], 0
    // Predicated region
    $region2: #{tpu_custom_call.1} parent=1 // pred_check
      _
    $region3: #{tpu_custom_call.1} parent=1 // pred_check_branch
      %11 = sbr.rel (0) target = $region5
    $region4: #{tpu_custom_call.1} parent=1 // pred_region
      %s13 = ssub.s32 2048, 2048
      %14 = vsyncadd [#allocation3], %s13
      %s15 = sshll.u32 [#allocation2], 4
      %s16 = int_to_ptr.vmem [resolvable:$true] %s15
      %21 = dma.hbm_to_vmem [thread:$0]  %s0, 2048, %s16, [#allocation3], 128, 128, 8
    $region5: #{tpu_custom_call.1} parent=1 // pred_fallthru
      _
    // Predicated region
    $region6: #{tpu_custom_call.1} parent=1 // pred_check
      _
    $region7: #{tpu_custom_call.1} parent=1 // pred_check_branch
      %23 = sbr.rel (0) target = $region9
    $region8: #{tpu_custom_call.1} parent=1 // pred_region
      %s25 = ssub.s32 2048, 2048
      %26 = vsyncadd [#allocation6], %s25
      %s27 = sshll.u32 [#allocation5], 4
      %s28 = int_to_ptr.vmem [resolvable:$true] %s27
      %33 = dma.hbm_to_vmem [thread:$0]  %s1, 2048, %s28, [#allocation6], 128, 128, 8
    $region9: #{tpu_custom_call.1} parent=1 // pred_fallthru
      _
    // Predicated region
    $region10: #{tpu_custom_call.1} parent=1 // pred_check
      _
    $region11: #{tpu_custom_call.1} parent=1 // pred_check_branch
      %35 = sbr.rel (0) target = $region13
    $region12: #{tpu_custom_call.1} parent=1 // pred_region
      %36 = dma.done [#allocation3], 2048
    $region13: #{tpu_custom_call.1} parent=1 // pred_fallthru
      _
    // Predicated region
    $region14: #{tpu_custom_call.1} parent=1 // pred_check
      _
    $region15: #{tpu_custom_call.1} parent=1 // pred_check_branch
      %38 = sbr.rel (0) target = $region17
    $region16: #{tpu_custom_call.1} parent=1 // pred_region
      %39 = dma.done [#allocation6], 2048
    $region17: #{tpu_custom_call.1} parent=1 // pred_fallthru
      _
    %v40 = vld [vmem:[#allocation2] sm:$0xff]
    %v41 = vld [vmem:[#allocation2 + $0x8] sm:$0xff]
    %v42 = vld [vmem:[#allocation2 + $0x10] sm:$0xff]
    %v43 = vld [vmem:[#allocation2 + $0x18] sm:$0xff]
    %v44 = vld [vmem:[#allocation2 + $0x20] sm:$0xff]
    %v45 = vld [vmem:[#allocation2 + $0x28] sm:$0xff]
    %v46 = vld [vmem:[#allocation2 + $0x30] sm:$0xff]
    %v47 = vld [vmem:[#allocation2 + $0x38] sm:$0xff]
    %v48 = vld [vmem:[#allocation2 + $0x40] sm:$0xff]
    %v49 = vld [vmem:[#allocation2 + $0x48] sm:$0xff]
    %v50 = vld [vmem:[#allocation2 + $0x50] sm:$0xff]
    %v51 = vld [vmem:[#allocation2 + $0x58] sm:$0xff]
    %v52 = vld [vmem:[#allocation2 + $0x60] sm:$0xff]
    %v53 = vld [vmem:[#allocation2 + $0x68] sm:$0xff]
    %v54 = vld [vmem:[#allocation2 + $0x70] sm:$0xff]
    %v55 = vld [vmem:[#allocation2 + $0x78] sm:$0xff]
    %v56 = vld [vmem:[#allocation5] sm:$0xff]
    %v57 = vld [vmem:[#allocation5 + $0x8] sm:$0xff]
    %v58 = vld [vmem:[#allocation5 + $0x10] sm:$0xff]
    %v59 = vld [vmem:[#allocation5 + $0x18] sm:$0xff]
    %v60 = vld [vmem:[#allocation5 + $0x20] sm:$0xff]
    %v61 = vld [vmem:[#allocation5 + $0x28] sm:$0xff]
    %v62 = vld [vmem:[#allocation5 + $0x30] sm:$0xff]
    %v63 = vld [vmem:[#allocation5 + $0x38] sm:$0xff]
    %v64 = vld [vmem:[#allocation5 + $0x40] sm:$0xff]
    %v65 = vld [vmem:[#allocation5 + $0x48] sm:$0xff]
    %v66 = vld [vmem:[#allocation5 + $0x50] sm:$0xff]
    %v67 = vld [vmem:[#allocation5 + $0x58] sm:$0xff]
    %v68 = vld [vmem:[#allocation5 + $0x60] sm:$0xff]
    %v69 = vld [vmem:[#allocation5 + $0x68] sm:$0xff]
    %v70 = vld [vmem:[#allocation5 + $0x70] sm:$0xff]
    %v71 = vld [vmem:[#allocation5 + $0x78] sm:$0xff]
    %vm72 = vcmp.ne.s32.totalorder %v56, 0
    %vm73 = vcmp.ne.s32.totalorder %v57, 0
    %vm74 = vcmp.ne.s32.totalorder %v58, 0
    %vm75 = vcmp.ne.s32.totalorder %v59, 0
    %vm76 = vcmp.ne.s32.totalorder %v60, 0
    %vm77 = vcmp.ne.s32.totalorder %v61, 0
    %vm78 = vcmp.ne.s32.totalorder %v62, 0
    %vm79 = vcmp.ne.s32.totalorder %v63, 0
    %vm80 = vcmp.ne.s32.totalorder %v64, 0
    %vm81 = vcmp.ne.s32.totalorder %v65, 0
    %vm82 = vcmp.ne.s32.totalorder %v66, 0
    %vm83 = vcmp.ne.s32.totalorder %v67, 0
    %vm84 = vcmp.ne.s32.totalorder %v68, 0
    %vm85 = vcmp.ne.s32.totalorder %v69, 0
    %vm86 = vcmp.ne.s32.totalorder %v70, 0
    %vm87 = vcmp.ne.s32.totalorder %v71, 0
    %v88 = vsel %vm72, %v40, -3.4028235e+38
    %v89 = vsel %vm73, %v41, -3.4028235e+38
    %v90 = vsel %vm74, %v42, -3.4028235e+38
    %v91 = vsel %vm75, %v43, -3.4028235e+38
    %v92 = vsel %vm76, %v44, -3.4028235e+38
    %v93 = vsel %vm77, %v45, -3.4028235e+38
    %v94 = vsel %vm78, %v46, -3.4028235e+38
    %v95 = vsel %vm79, %v47, -3.4028235e+38
    %v96 = vsel %vm80, %v48, -3.4028235e+38
    %v97 = vsel %vm81, %v49, -3.4028235e+38
    %v98 = vsel %vm82, %v50, -3.4028235e+38
    %v99 = vsel %vm83, %v51, -3.4028235e+38
    %v100 = vsel %vm84, %v52, -3.4028235e+38
    %v101 = vsel %vm85, %v53, -3.4028235e+38
    %v102 = vsel %vm86, %v54, -3.4028235e+38
    %v103 = vsel %vm87, %v55, -3.4028235e+38
    %104 = vmax.xlane.f32.xlu0 %v88
    %v105 = vpop.xlane.xlu0 %104
    %106 = vmax.xlane.f32.xlu0 %v89
    %v107 = vpop.xlane.xlu0 %106
    %108 = vmax.xlane.f32.xlu0 %v90
    %v109 = vpop.xlane.xlu0 %108
    %110 = vmax.xlane.f32.xlu0 %v91
    %v111 = vpop.xlane.xlu0 %110
    %112 = vmax.xlane.f32.xlu0 %v92
    %v113 = vpop.xlane.xlu0 %112
    %114 = vmax.xlane.f32.xlu0 %v93
    %v115 = vpop.xlane.xlu0 %114
    %116 = vmax.xlane.f32.xlu0 %v94
    %v117 = vpop.xlane.xlu0 %116
    %118 = vmax.xlane.f32.xlu0 %v95
    %v119 = vpop.xlane.xlu0 %118
    %120 = vmax.xlane.f32.xlu0 %v96
    %v121 = vpop.xlane.xlu0 %120
    %122 = vmax.xlane.f32.xlu0 %v97
    %v123 = vpop.xlane.xlu0 %122
    %124 = vmax.xlane.f32.xlu0 %v98
    %v125 = vpop.xlane.xlu0 %124
    %126 = vmax.xlane.f32.xlu0 %v99
    %v127 = vpop.xlane.xlu0 %126
    %128 = vmax.xlane.f32.xlu0 %v100
    %v129 = vpop.xlane.xlu0 %128
    %130 = vmax.xlane.f32.xlu0 %v101
    %v131 = vpop.xlane.xlu0 %130
    %132 = vmax.xlane.f32.xlu0 %v102
    %v133 = vpop.xlane.xlu0 %132
    %134 = vmax.xlane.f32.xlu0 %v103
    %v135 = vpop.xlane.xlu0 %134
    %v136 = vsub.f32 %v88, %v105
    %v137 = vsub.f32 %v89, %v107
    %v138 = vsub.f32 %v90, %v109
    %v139 = vsub.f32 %v91, %v111
    %v140 = vsub.f32 %v92, %v113
    %v141 = vsub.f32 %v93, %v115
    %v142 = vsub.f32 %v94, %v117
    %v143 = vsub.f32 %v95, %v119
    %v144 = vsub.f32 %v96, %v121
    %v145 = vsub.f32 %v97, %v123
    %v146 = vsub.f32 %v98, %v125
    %v147 = vsub.f32 %v99, %v127
    %v148 = vsub.f32 %v100, %v129
    %v149 = vsub.f32 %v101, %v131
    %v150 = vsub.f32 %v102, %v133
    %v151 = vsub.f32 %v103, %v135
    %v152 = vmul.f32 %v136, 1.442695
    %v153 = vpow.pop %v152
    %v154 = vmul.f32 %v137, 1.442695
    %v155 = vpow.pop %v154
    %v156 = vmul.f32 %v138, 1.442695
    %v157 = vpow.pop %v156
    %v158 = vmul.f32 %v139, 1.442695
    %v159 = vpow.pop %v158
    %v160 = vmul.f32 %v140, 1.442695
    %v161 = vpow.pop %v160
    %v162 = vmul.f32 %v141, 1.442695
    %v163 = vpow.pop %v162
    %v164 = vmul.f32 %v142, 1.442695
    %v165 = vpow.pop %v164
    %v166 = vmul.f32 %v143, 1.442695
    %v167 = vpow.pop %v166
    %v168 = vmul.f32 %v144, 1.442695
    %v169 = vpow.pop %v168
    %v170 = vmul.f32 %v145, 1.442695
    %v171 = vpow.pop %v170
    %v172 = vmul.f32 %v146, 1.442695
    %v173 = vpow.pop %v172
    %v174 = vmul.f32 %v147, 1.442695
    %v175 = vpow.pop %v174
    %v176 = vmul.f32 %v148, 1.442695
    %v177 = vpow.pop %v176
    %v178 = vmul.f32 %v149, 1.442695
    %v179 = vpow.pop %v178
    %v180 = vmul.f32 %v150, 1.442695
    %v181 = vpow.pop %v180
    %v182 = vmul.f32 %v151, 1.442695
    %v183 = vpow.pop %v182
    %184 = vadd.xlane.f32.xlu0 %v153
    %v185 = vpop.xlane.xlu0 %184
    %186 = vadd.xlane.f32.xlu0 %v155
    %v187 = vpop.xlane.xlu0 %186
    %188 = vadd.xlane.f32.xlu0 %v157
    %v189 = vpop.xlane.xlu0 %188
    %190 = vadd.xlane.f32.xlu0 %v159
    %v191 = vpop.xlane.xlu0 %190
    %192 = vadd.xlane.f32.xlu0 %v161
    %v193 = vpop.xlane.xlu0 %192
    %194 = vadd.xlane.f32.xlu0 %v163
    %v195 = vpop.xlane.xlu0 %194
    %196 = vadd.xlane.f32.xlu0 %v165
    %v197 = vpop.xlane.xlu0 %196
    %198 = vadd.xlane.f32.xlu0 %v167
    %v199 = vpop.xlane.xlu0 %198
    %200 = vadd.xlane.f32.xlu0 %v169
    %v201 = vpop.xlane.xlu0 %200
    %202 = vadd.xlane.f32.xlu0 %v171
    %v203 = vpop.xlane.xlu0 %202
    %204 = vadd.xlane.f32.xlu0 %v173
    %v205 = vpop.xlane.xlu0 %204
    %206 = vadd.xlane.f32.xlu0 %v175
    %v207 = vpop.xlane.xlu0 %206
    %208 = vadd.xlane.f32.xlu0 %v177
    %v209 = vpop.xlane.xlu0 %208
    %210 = vadd.xlane.f32.xlu0 %v179
    %v211 = vpop.xlane.xlu0 %210
    %212 = vadd.xlane.f32.xlu0 %v181
    %v213 = vpop.xlane.xlu0 %212
    %214 = vadd.xlane.f32.xlu0 %v183
    %v215 = vpop.xlane.xlu0 %214
    %v216 = vrcp.pop %v185
    %v217 = vrcp.pop %v187
    %v218 = vrcp.pop %v189
    %v219 = vrcp.pop %v191
    %v220 = vrcp.pop %v193
    %v221 = vrcp.pop %v195
    %v222 = vrcp.pop %v197
    %v223 = vrcp.pop %v199
    %v224 = vrcp.pop %v201
    %v225 = vrcp.pop %v203
    %v226 = vrcp.pop %v205
    %v227 = vrcp.pop %v207
    %v228 = vrcp.pop %v209
    %v229 = vrcp.pop %v211
    %v230 = vrcp.pop %v213
    %v231 = vrcp.pop %v215
    %v232 = vmul.f32 %v153, %v216
    %v233 = vmul.f32 %v155, %v217
    %v234 = vmul.f32 %v157, %v218
    %v235 = vmul.f32 %v159, %v219
    %v236 = vmul.f32 %v161, %v220
    %v237 = vmul.f32 %v163, %v221
    %v238 = vmul.f32 %v165, %v222
    %v239 = vmul.f32 %v167, %v223
    %v240 = vmul.f32 %v169, %v224
    %v241 = vmul.f32 %v171, %v225
    %v242 = vmul.f32 %v173, %v226
    %v243 = vmul.f32 %v175, %v227
    %v244 = vmul.f32 %v177, %v228
    %v245 = vmul.f32 %v179, %v229
    %v246 = vmul.f32 %v181, %v230
    %v247 = vmul.f32 %v183, %v231
    %248 = vst [vmem:[#allocation7] sm:$0xff] %v232
    %249 = vst [vmem:[#allocation7 + $0x8] sm:$0xff] %v233
    %250 = vst [vmem:[#allocation7 + $0x10] sm:$0xff] %v234
    %251 = vst [vmem:[#allocation7 + $0x18] sm:$0xff] %v235
    %252 = vst [vmem:[#allocation7 + $0x20] sm:$0xff] %v236
    %253 = vst [vmem:[#allocation7 + $0x28] sm:$0xff] %v237
    %254 = vst [vmem:[#allocation7 + $0x30] sm:$0xff] %v238
    %255 = vst [vmem:[#allocation7 + $0x38] sm:$0xff] %v239
    %256 = vst [vmem:[#allocation7 + $0x40] sm:$0xff] %v240
    %257 = vst [vmem:[#allocation7 + $0x48] sm:$0xff] %v241
    %258 = vst [vmem:[#allocation7 + $0x50] sm:$0xff] %v242
    %259 = vst [vmem:[#allocation7 + $0x58] sm:$0xff] %v243
    %260 = vst [vmem:[#allocation7 + $0x60] sm:$0xff] %v244
    %261 = vst [vmem:[#allocation7 + $0x68] sm:$0xff] %v245
    %262 = vst [vmem:[#allocation7 + $0x70] sm:$0xff] %v246
    %263 = vst [vmem:[#allocation7 + $0x78] sm:$0xff] %v247
    // Predicated region
    $region18: #{tpu_custom_call.1} parent=1 // pred_check
      _
    $region19: #{tpu_custom_call.1} parent=1 // pred_check_branch
      %265 = sbr.rel (0) target = $region21
    $region20: #{tpu_custom_call.1} parent=1 // pred_region
      %s267 = ssub.s32 2048, 2048
      %268 = vsyncadd [#allocation4], %s267
      %s269 = sshll.u32 [#allocation7], 4
      %s270 = int_to_ptr.vmem [resolvable:$true] %s269
      %275 = dma.vmem_to_hbm [thread:$0]  %s270, 2048, %s2, [#allocation4], 128, 128, 8
    $region21: #{tpu_custom_call.1} parent=1 // pred_fallthru
      _
    // Predicated region
    $region22: #{tpu_custom_call.1} parent=1 // pred_check
      _
    $region23: #{tpu_custom_call.1} parent=1 // pred_check_branch
      %277 = sbr.rel (0) target = $region25
    $region24: #{tpu_custom_call.1} parent=1 // pred_region
      %278 = dma.done [#allocation4], 2048
    $region25: #{tpu_custom_call.1} parent=1 // pred_fallthru
      _
    %279 = vsyncpa [#allocation3], 1
    %280 = vsyncpa [#allocation6], 1
    %281 = vsyncpa [#allocation4], 1

</llo_original>
